<compile_context>
chip_gen: v6e
topology: v6e:2x2x1
jax: 0.10.0
libtpu: 0.0.40
codegen_flags: <defaults>
</compile_context>

<pallas_src>
import functools

import jax
import jax.numpy as jnp
from jax.experimental import pallas as pl
from jax.experimental.pallas import tpu as pltpu

LN_EPS = 1e-5  # torch.nn.LayerNorm default


def _round_up(a, b):
    return (a + b - 1) // b * b


def _vmem_capacity_bytes():
    """Physical VMEM per TensorCore, with a conservative (v7x-safe) fallback."""
    try:
        info = pltpu.get_tpu_info()
    except Exception:
        return 64 << 20
    for name in ("vmem_capacity_bytes", "vmem_size_bytes", "vmem_bytes"):
        v = getattr(info, name, None)
        if isinstance(v, int) and v > 0:
            return v
    return 64 << 20


def _choose_tm(n, tile_m, g=16):
    """Row tile: multiple of g, <= tile_m, prefers an exact divisor of n (no
    wrapper pad/slice) and aims for >= 2 row tiles (v7x megacore)."""
    cap = _round_up(n, g)
    cap = max(g, _round_up(cap // 2, g))          # aim for >= 2 row tiles
    tm = max(g, min(_round_up(tile_m, g), cap))
    for cand in range(tm, max(g, tm // 2) - 1, -g):
        if n % cand == 0:
            return cand
    return tm


def _choose_tk(d_inner, tile_k):
    """Largest 128-multiple divisor of d_inner that is <= tile_k."""
    if d_inner % 128 != 0:
        return d_inner                            # not lane-tileable; single slab
    tk = max(128, min(tile_k // 128 * 128, d_inner))
    while d_inner % tk != 0:
        tk -= 128
    return tk


def _resident_vmem_bytes(tm, d_model, d_inner, wsize):
    x_b = 2 * tm * d_model * 4                    # x, double buffered
    o_b = 2 * tm * d_model * 4                    # out, double buffered
    w_b = 2 * (2 * d_model * d_inner) * wsize     # W1+W2, default double buffer
    h_b = tm * d_inner * (4 + wsize)              # intermediate activation + cast
    vec_b = 4 * (d_inner + 3 * d_model) * 4       # biases / gamma / beta
    return x_b + o_b + w_b + h_b + vec_b


def _ktiled_vmem_bytes(tm, tk, d_model, wsize):
    x_b = 2 * tm * d_model * 4
    o_b = 2 * tm * d_model * 4
    w_b = 2 * (2 * d_model * tk) * wsize          # W1/W2 slabs, double buffered
    cin_b = tm * d_model * wsize                  # hoisted bf16 core_in scratch
    h_b = tm * tk * 4
    vec_b = 4 * (tk + 3 * d_model) * 4
    return x_b + o_b + w_b + cin_b + h_b + vec_b


def _layer_norm(z, gamma, beta):
    mean = jnp.mean(z, axis=-1, keepdims=True)
    cz = z - mean
    var = jnp.mean(cz * cz, axis=-1, keepdims=True)
    return cz * jax.lax.rsqrt(var + LN_EPS) * gamma + beta


def _ff_kernel_resident(x_ref, w1_ref, b1_ref, w2_ref, b2_ref, g_ref, beta_ref,
                        o_ref, *, pre_lnorm, mxu_dtype):
    """Weights fully resident in VMEM; one grid step = one row tile."""
    x = x_ref[...].astype(jnp.float32)
    g, beta = g_ref[...], beta_ref[...]
    core_in = _layer_norm(x, g, beta) if pre_lnorm else x
    h = jnp.dot(core_in.astype(mxu_dtype), w1_ref[...],
                preferred_element_type=jnp.float32)
    h = jnp.maximum(h + b1_ref[...], 0.0)
    core = jnp.dot(h.astype(mxu_dtype), w2_ref[...],
                   preferred_element_type=jnp.float32) + b2_ref[...]
    out = x + core if pre_lnorm else _layer_norm(x + core, g, beta)
    o_ref[...] = out.astype(o_ref.dtype)


def _ff_kernel_ktiled(x_ref, w1_ref, b1_ref, w2_ref, b2_ref, g_ref, beta_ref,
                      o_ref, cin_ref, *, pre_lnorm, mxu_dtype):
    """d_inner tiled along trailing grid axis; accumulate into resident o_ref."""
    k = pl.program_id(1)
    nk = pl.num_programs(1)

    @pl.when(k == 0)
    def _():
        # Hoisted once per row tile: (optional) LayerNorm + bf16 cast of x.
        x = x_ref[...].astype(jnp.float32)
        core_in = _layer_norm(x, g_ref[...], beta_ref[...]) if pre_lnorm else x
        cin_ref[...] = core_in.astype(mxu_dtype)
        o_ref[...] = jnp.zeros_like(o_ref)

    # Linear1 columns [k*tk, (k+1)*tk) on the MXU (bf16 in, f32 acc),
    # bias + ReLU in f32 on the VPU.
    h = jnp.dot(cin_ref[...], w1_ref[...], preferred_element_type=jnp.float32)
    h = jnp.maximum(h + b1_ref[...], 0.0)
    # Partial Linear2 contribution; the o_ref block index is constant across k,
    # so it stays resident in VMEM and serves as the f32 accumulator.
    o_ref[...] += jnp.dot(h.astype(mxu_dtype), w2_ref[...],
                          preferred_element_type=jnp.float32)

    @pl.when(k == nk - 1)
    def _():
        x = x_ref[...].astype(jnp.float32)
        core = o_ref[...] + b2_ref[...]
        if pre_lnorm:
            o_ref[...] = (x + core).astype(o_ref.dtype)
        else:
            o_ref[...] = _layer_norm(
                x + core, g_ref[...], beta_ref[...]).astype(o_ref.dtype)


def positionwise_ff(inp, params, *, pre_lnorm=False, tile_m=None, tile_k=1024,
                    mxu_dtype=jnp.bfloat16, weights_resident=None):
    """inp: (seq, batch, d_model).  params = (w1, b1, w2, b2, gamma, beta)."""
    w1, b1, w2, b2, gamma, beta = params
    seq, batch, d_model = inp.shape
    d_inner = w1.shape[1]
    n = seq * batch
    wsize = jnp.dtype(mxu_dtype).itemsize

    # Per-generation VMEM budget: never request the whole physical VMEM
    # (v7x has only 64 MiB/TC -> ~48 MiB; ~96 MiB on 128-MiB v5e/v6e parts).
    vmem_phys = _vmem_capacity_bytes()
    vmem_limit = min(vmem_phys * 3 // 4, 100 << 20)
    budget = int(vmem_limit * 0.85)

    if tile_m is None:
        tile_m = 1024 if vmem_phys >= (128 << 20) else 512

    tm = _choose_tm(n, tile_m)
    n_pad = _round_up(n, tm)
    n_row_tiles = n_pad // tm

    weight_bytes = 2 * d_model * d_inner * wsize  # W1 + W2 in mxu_dtype

    if weights_resident is None:
        weights_resident = (
            _resident_vmem_bytes(tm, d_model, d_inner, wsize) <= budget)

    x2d = inp.reshape(n, d_model).astype(jnp.float32)
    if n_pad != n:
        # Tail rows are zero-padded and sliced off again below; _choose_tm
        # prefers a divisor of seq*batch so this path is usually skipped.
        x2d = jnp.pad(x2d, ((0, n_pad - n), (0, 0)))

    # bf16 weights (half HBM traffic / VMEM residency); vectors stay f32.
    w1c = w1.astype(mxu_dtype)
    w2c = w2.astype(mxu_dtype)
    b1r = b1.reshape(1, d_inner).astype(jnp.float32)
    b2r = b2.reshape(1, d_model).astype(jnp.float32)
    gr = gamma.reshape(1, d_model).astype(jnp.float32)
    br = beta.reshape(1, d_model).astype(jnp.float32)

    act_bytes = 2 * n_pad * d_model * 4           # x read + out write
    vec_bytes = (d_inner + 3 * d_model) * 4
    flops = 4 * n_pad * d_model * d_inner         # two matmuls

    if weights_resident:
        kernel = functools.partial(_ff_kernel_resident, pre_lnorm=pre_lnorm,
                                   mxu_dtype=mxu_dtype)
        grid_spec = pltpu.PrefetchScalarGridSpec(
            num_scalar_prefetch=0,
            grid=(n_row_tiles,),
            in_specs=[
                pl.BlockSpec((tm, d_model), lambda i: (i, 0)),        # x tile
                pl.BlockSpec((d_model, d_inner), lambda i: (0, 0)),   # W1 (resident)
                pl.BlockSpec((1, d_inner), lambda i: (0, 0)),         # b1
                pl.BlockSpec((d_inner, d_model), lambda i: (0, 0)),   # W2 (resident)
                pl.BlockSpec((1, d_model), lambda i: (0, 0)),         # b2
                pl.BlockSpec((1, d_model), lambda i: (0, 0)),         # gamma
                pl.BlockSpec((1, d_model), lambda i: (0, 0)),         # beta
            ],
            out_specs=pl.BlockSpec((tm, d_model), lambda i: (i, 0)),
        )
        dim_sem = ("parallel",)
        bytes_accessed = act_bytes + weight_bytes + vec_bytes   # weights: 1 pass
    else:
        tk = _choose_tk(d_inner, tile_k)
        while (tk > 128 and tk % 256 == 0
               and _ktiled_vmem_bytes(tm, tk, d_model, wsize) > budget):
            tk //= 2
        nk = d_inner // tk
        kernel = functools.partial(_ff_kernel_ktiled, pre_lnorm=pre_lnorm,
                                   mxu_dtype=mxu_dtype)
        grid_spec = pltpu.PrefetchScalarGridSpec(
            num_scalar_prefetch=0,
            grid=(n_row_tiles, nk),                 # reduction (d_inner) axis last
            in_specs=[
                pl.BlockSpec((tm, d_model), lambda i, k: (i, 0)),   # x (resident over k)
                pl.BlockSpec((d_model, tk), lambda i, k: (0, k)),   # W1 slab
                pl.BlockSpec((1, tk), lambda i, k: (0, k)),         # b1 slab
                pl.BlockSpec((tk, d_model), lambda i, k: (k, 0)),   # W2 slab
                pl.BlockSpec((1, d_model), lambda i, k: (0, 0)),    # b2
                pl.BlockSpec((1, d_model), lambda i, k: (0, 0)),    # gamma
                pl.BlockSpec((1, d_model), lambda i, k: (0, 0)),    # beta
            ],
            out_specs=pl.BlockSpec((tm, d_model), lambda i, k: (i, 0)),
            scratch_shapes=[pltpu.VMEM((tm, d_model), mxu_dtype)],  # hoisted core_in
        )
        dim_sem = ("parallel", "arbitrary")
        # k-tiled path re-streams the full weight matrices once per row tile.
        bytes_accessed = act_bytes + n_row_tiles * weight_bytes + vec_bytes

    cost = pl.CostEstimate(flops=flops, transcendentals=n_pad,
                           bytes_accessed=bytes_accessed)

    out2d = pl.pallas_call(
        kernel,
        out_shape=jax.ShapeDtypeStruct((n_pad, d_model), jnp.float32),
        grid_spec=grid_spec,
        compiler_params=pltpu.CompilerParams(
            dimension_semantics=dim_sem,
            vmem_limit_bytes=int(vmem_limit)),
        cost_estimate=cost,
    )(x2d, w1c, b1r, w2c, b2r, gr, br)

    if n_pad != n:
        out2d = out2d[:n]
    return out2d.reshape(seq, batch, d_model)


def _reference(inp, params, *, pre_lnorm=False, mxu_dtype=jnp.bfloat16):
    """Pure-JAX reference matching the kernel's bf16-in / f32-accumulate matmuls."""
    w1, b1, w2, b2, gamma, beta = params

    def ln(z):
        mean = jnp.mean(z, axis=-1, keepdims=True)
        var = jnp.mean((z - mean) ** 2, axis=-1, keepdims=True)
        return (z - mean) / jnp.sqrt(var + LN_EPS) * gamma + beta

    core_in = ln(inp) if pre_lnorm else inp
    w1b = w1.astype(mxu_dtype).astype(jnp.float32)
    w2b = w2.astype(mxu_dtype).astype(jnp.float32)
    xb = core_in.astype(mxu_dtype).astype(jnp.float32)
    h = jnp.maximum(xb @ w1b + b1, 0.0)
    hb = h.astype(mxu_dtype).astype(jnp.float32)
    core = hb @ w2b + b2
    return core + inp if pre_lnorm else ln(inp + core)


def init_params(key, d_model, d_inner):
    k1, k2, k3, k4 = jax.random.split(key, 4)
    # nn.Linear default init: U(-1/sqrt(fan_in), 1/sqrt(fan_in)); weights stored
    # transposed to (in, out) for x @ W.
    lim1 = 1.0 / (d_model ** 0.5)
    lim2 = 1.0 / (d_inner ** 0.5)
    w1 = jax.random.uniform(k1, (d_model, d_inner), jnp.float32, -lim1, lim1)
    b1 = jax.random.uniform(k2, (d_inner,), jnp.float32, -lim1, lim1)
    w2 = jax.random.uniform(k3, (d_inner, d_model), jnp.float32, -lim2, lim2)
    b2 = jax.random.uniform(k4, (d_model,), jnp.float32, -lim2, lim2)
    gamma = jnp.ones((d_model,), jnp.float32)     # nn.LayerNorm init
    beta = jnp.zeros((d_model,), jnp.float32)
    return (w1, b1, w2, b2, gamma, beta)


if __name__ == "__main__":
    # TODO(synk): dropout is treated as identity (inference mode); training-mode
    # stochastic dropout would use pltpu.prng_seed / prng_random_bits.
    # Small, lane-dense demo dims: d_model multiple of 128; n = seq*batch = 32
    # gives 2 row tiles (exercises the parallel row axis), and d_inner = 256
    # splits into 2 k slabs on the forced k-tiled run (exercises the accumulator).
    seq, batch, d_model, d_inner = 16, 2, 128, 256
    key = jax.random.PRNGKey(0)
    kx, kp = jax.random.split(key)
    x = jax.random.normal(kx, (seq, batch, d_model), jnp.float32)
    params = init_params(kp, d_model, d_inner)

    for pre_lnorm in (False, True):
        ref = _reference(x, params, pre_lnorm=pre_lnorm)

        # Weights-resident path (auto-selected at this size).
        out = jax.block_until_ready(
            positionwise_ff(x, params, pre_lnorm=pre_lnorm))
        assert out.shape == (seq, batch, d_model)
        assert jnp.allclose(out, ref, atol=1e-2, rtol=1e-2), (
            f"resident-path mismatch (pre_lnorm={pre_lnorm})")

        # k-tiled fallback path (forced) — accumulates into resident o_ref.
        out_kt = jax.block_until_ready(
            positionwise_ff(x, params, pre_lnorm=pre_lnorm,
                            weights_resident=False, tile_k=128))
        assert jnp.allclose(out_kt, ref, atol=1e-2, rtol=1e-2), (
            f"k-tiled-path mismatch (pre_lnorm={pre_lnorm})")

    print("KERNEL_OK")
</pallas_src>

<mosaic_0001>
module attributes {stable_mosaic.version = 11 : i64} {
  func.func @_ff_kernel_resident(%arg0: i32, %arg1: memref<16x128xf32, #tpu.memory_space<vmem>>, %arg2: memref<128x256xbf16, #tpu.memory_space<vmem>>, %arg3: memref<1x256xf32, #tpu.memory_space<vmem>>, %arg4: memref<256x128xbf16, #tpu.memory_space<vmem>>, %arg5: memref<1x128xf32, #tpu.memory_space<vmem>>, %arg6: memref<1x128xf32, #tpu.memory_space<vmem>>, %arg7: memref<1x128xf32, #tpu.memory_space<vmem>>, %arg8: memref<16x128xf32, #tpu.memory_space<vmem>>) attributes {dimension_semantics = [#tpu.dimension_semantics<parallel>], iteration_bounds = array<i64: 2>, scalar_prefetch = 0 : i64, scratch_operands = 0 : i64, tpu.core_type = #tpu.core_type<tc>, window_params = [{transform_indices = @transform_0, window_bounds = array<i64: 16, 128>}, {pipeline_mode = #tpu.pipeline_mode<synchronous>, transform_indices = @transform_1, window_bounds = array<i64: 128, 256>}, {pipeline_mode = #tpu.pipeline_mode<synchronous>, transform_indices = @transform_2, window_bounds = array<i64: 1, 256>}, {pipeline_mode = #tpu.pipeline_mode<synchronous>, transform_indices = @transform_3, window_bounds = array<i64: 256, 128>}, {pipeline_mode = #tpu.pipeline_mode<synchronous>, transform_indices = @transform_4, window_bounds = array<i64: 1, 128>}, {pipeline_mode = #tpu.pipeline_mode<synchronous>, transform_indices = @transform_5, window_bounds = array<i64: 1, 128>}, {pipeline_mode = #tpu.pipeline_mode<synchronous>, transform_indices = @transform_6, window_bounds = array<i64: 1, 128>}, {transform_indices = @transform_7, window_bounds = array<i64: 16, 128>}]} {
    %c0 = arith.constant 0 : index
    %c0_0 = arith.constant 0 : index
    %0 = vector.load %arg1[%c0, %c0_0] : memref<16x128xf32, #tpu.memory_space<vmem>>, vector<16x128xf32>
    %c0_1 = arith.constant 0 : index
    %c0_2 = arith.constant 0 : index
    %1 = vector.load %arg6[%c0_1, %c0_2] : memref<1x128xf32, #tpu.memory_space<vmem>>, vector<1x128xf32>
    %c0_3 = arith.constant 0 : index
    %c0_4 = arith.constant 0 : index
    %2 = vector.load %arg7[%c0_3, %c0_4] : memref<1x128xf32, #tpu.memory_space<vmem>>, vector<1x128xf32>
    %3 = arith.truncf %0 : vector<16x128xf32> to vector<16x128xbf16>
    %c0_5 = arith.constant 0 : index
    %c0_6 = arith.constant 0 : index
    %4 = vector.load %arg2[%c0_5, %c0_6] : memref<128x256xbf16, #tpu.memory_space<vmem>>, vector<128x256xbf16>
    %cst = arith.constant dense<0.000000e+00> : vector<16x256xf32>
    %5 = tpu.matmul %3, %4, %cst {dimension_numbers = #tpu.dot_dimension_numbers<[1], [0], [0], [1], [0, 0, 1, 1], [], []>} : vector<16x128xbf16>, vector<128x256xbf16>, vector<16x256xf32> -> vector<16x256xf32>
    %c0_7 = arith.constant 0 : index
    %c0_8 = arith.constant 0 : index
    %6 = vector.load %arg3[%c0_7, %c0_8] : memref<1x256xf32, #tpu.memory_space<vmem>>, vector<1x256xf32>
    %7 = vector.broadcast %6 : vector<1x256xf32> to vector<16x256xf32>
    %8 = arith.addf %5, %7 : vector<16x256xf32>
    %cst_9 = arith.constant 0.000000e+00 : f32
    %9 = vector.broadcast %cst_9 : f32 to vector<16x256xf32>
    %10 = arith.maximumf %8, %9 : vector<16x256xf32>
    %11 = arith.truncf %10 : vector<16x256xf32> to vector<16x256xbf16>
    %c0_10 = arith.constant 0 : index
    %c0_11 = arith.constant 0 : index
    %12 = vector.load %arg4[%c0_10, %c0_11] : memref<256x128xbf16, #tpu.memory_space<vmem>>, vector<256x128xbf16>
    %cst_12 = arith.constant dense<0.000000e+00> : vector<16x128xf32>
    %13 = tpu.matmul %11, %12, %cst_12 {dimension_numbers = #tpu.dot_dimension_numbers<[1], [0], [0], [1], [0, 0, 1, 1], [], []>} : vector<16x256xbf16>, vector<256x128xbf16>, vector<16x128xf32> -> vector<16x128xf32>
    %c0_13 = arith.constant 0 : index
    %c0_14 = arith.constant 0 : index
    %14 = vector.load %arg5[%c0_13, %c0_14] : memref<1x128xf32, #tpu.memory_space<vmem>>, vector<1x128xf32>
    %15 = vector.broadcast %14 : vector<1x128xf32> to vector<16x128xf32>
    %16 = arith.addf %13, %15 : vector<16x128xf32>
    %17 = arith.addf %0, %16 : vector<16x128xf32>
    %cst_15 = arith.constant dense<0.000000e+00> : vector<16xf32>
    %18 = vector.multi_reduction <add>, %17, %cst_15 [1] : vector<16x128xf32> to vector<16xf32>
    %19 = vector.shape_cast %18 : vector<16xf32> to vector<16x1xf32>
    %cst_16 = arith.constant 1.280000e+02 : f32
    %20 = vector.broadcast %cst_16 : f32 to vector<16x1xf32>
    %21 = arith.divf %19, %20 : vector<16x1xf32>
    %22 = vector.broadcast %21 : vector<16x1xf32> to vector<16x128xf32>
    %23 = arith.subf %17, %22 : vector<16x128xf32>
    %24 = arith.mulf %23, %23 : vector<16x128xf32>
    %cst_17 = arith.constant dense<0.000000e+00> : vector<16xf32>
    %25 = vector.multi_reduction <add>, %24, %cst_17 [1] : vector<16x128xf32> to vector<16xf32>
    %26 = vector.shape_cast %25 : vector<16xf32> to vector<16x1xf32>
    %cst_18 = arith.constant 1.280000e+02 : f32
    %27 = vector.broadcast %cst_18 : f32 to vector<16x1xf32>
    %28 = arith.divf %26, %27 : vector<16x1xf32>
    %cst_19 = arith.constant 9.99999974E-6 : f32
    %29 = vector.broadcast %cst_19 : f32 to vector<16x1xf32>
    %30 = arith.addf %28, %29 : vector<16x1xf32>
    %31 = math.rsqrt %30 : vector<16x1xf32>
    %32 = vector.broadcast %31 : vector<16x1xf32> to vector<16x128xf32>
    %33 = arith.mulf %23, %32 : vector<16x128xf32>
    %34 = vector.broadcast %1 : vector<1x128xf32> to vector<16x128xf32>
    %35 = arith.mulf %33, %34 : vector<16x128xf32>
    %36 = vector.broadcast %2 : vector<1x128xf32> to vector<16x128xf32>
    %37 = arith.addf %35, %36 : vector<16x128xf32>
    %c0_20 = arith.constant 0 : index
    %c0_21 = arith.constant 0 : index
    %38 = vector.load %arg8[%c0_20, %c0_21] : memref<16x128xf32, #tpu.memory_space<vmem>>, vector<16x128xf32>
    tpu.vector_store %arg8[%c0_20, %c0_21], %37 {strides = array<i32>} : memref<16x128xf32, #tpu.memory_space<vmem>>, vector<16x128xf32>,
    return
  }
  func.func @transform_0(%arg0: i32) -> (i32, i32) {
    %c0_i32 = arith.constant 0 : i32
    %c0_i32_0 = arith.constant 0 : i32
    return %arg0, %c0_i32 : i32, i32
  }
  func.func @transform_1(%arg0: i32) -> (i32, i32) {
    %c0_i32 = arith.constant 0 : i32
    %c0_i32_0 = arith.constant 0 : i32
    %c0_i32_1 = arith.constant 0 : i32
    return %c0_i32, %c0_i32_0 : i32, i32
  }
  func.func @transform_2(%arg0: i32) -> (i32, i32) {
    %c0_i32 = arith.constant 0 : i32
    %c0_i32_0 = arith.constant 0 : i32
    %c0_i32_1 = arith.constant 0 : i32
    return %c0_i32, %c0_i32_0 : i32, i32
  }
  func.func @transform_3(%arg0: i32) -> (i32, i32) {
    %c0_i32 = arith.constant 0 : i32
    %c0_i32_0 = arith.constant 0 : i32
    %c0_i32_1 = arith.constant 0 : i32
    return %c0_i32, %c0_i32_0 : i32, i32
  }
  func.func @transform_4(%arg0: i32) -> (i32, i32) {
    %c0_i32 = arith.constant 0 : i32
    %c0_i32_0 = arith.constant 0 : i32
    %c0_i32_1 = arith.constant 0 : i32
    return %c0_i32, %c0_i32_0 : i32, i32
  }
  func.func @transform_5(%arg0: i32) -> (i32, i32) {
    %c0_i32 = arith.constant 0 : i32
    %c0_i32_0 = arith.constant 0 : i32
    %c0_i32_1 = arith.constant 0 : i32
    return %c0_i32, %c0_i32_0 : i32, i32
  }
  func.func @transform_6(%arg0: i32) -> (i32, i32) {
    %c0_i32 = arith.constant 0 : i32
    %c0_i32_0 = arith.constant 0 : i32
    %c0_i32_1 = arith.constant 0 : i32
    return %c0_i32, %c0_i32_0 : i32, i32
  }
  func.func @transform_7(%arg0: i32) -> (i32, i32) {
    %c0_i32 = arith.constant 0 : i32
    %c0_i32_0 = arith.constant 0 : i32
    return %arg0, %c0_i32 : i32, i32
  }
}

</mosaic_0001>

<llo_original>
// kernel: tpu_custom_call.1
$region0: #{tpu_custom_call.1}
  #allocation0 [shape = 'u32[]', space=smem, size = 0x4, offset = 0x4, fixed_abs, tag = 'smem constant byte address 0x4 - core index']
  #allocation1 [shape = 'u32[144,128]{1,0:T(1,128)}', space=vmem, size = 0x12000, scoped, tag = 'internal scratch']
  %s0 = inlined_call_operand.hbm [shape: f32[32,128], index: 0, kind: input, shape index: {}]
  %s1 = inlined_call_operand.hbm [shape: bf16[128,256], index: 1, kind: input, shape index: {}]
  %s2 = inlined_call_operand.vmem [shape: f32[1,256], index: 2, kind: input, shape index: {}]
  %s3 = inlined_call_operand.hbm [shape: bf16[256,128], index: 3, kind: input, shape index: {}]
  %s4 = inlined_call_operand.vmem [shape: f32[1,128], index: 4, kind: input, shape index: {}]
  %s5 = inlined_call_operand.vmem [shape: f32[1,128], index: 5, kind: input, shape index: {}]
  %s6 = inlined_call_operand.vmem [shape: f32[1,128], index: 6, kind: input, shape index: {}]
  %s7 = inlined_call_operand.hbm [shape: f32[32,128], index: 7, kind: output, shape index: {}]
  %s8 = sld [smem:[#allocation0]]
  $region73: #{tpu_custom_call.1} parent=0
    _
  %s10 = ssub.s32 1, %s8
  %s11 = scalar_select 0, %s10, %s8
  $region1: #{tpu_custom_call.1} parent=0
    #allocation2 [shape = 'u8[16384]{0}', space=vmem, size = 0x4000, scoped, tag = 'input window, operand 0']
    #allocation3 [shape = 's32[2]{0}', space=sflag, size = 0x8, scoped, tag = 'scoped memory for tpu_custom_call.1']
    #allocation4 [shape = 's32[2]{0}', space=sflag, size = 0x8, scoped, tag = 'scoped memory for tpu_custom_call.1']
    #allocation5 [shape = 'u8[65536]{0}', space=vmem, size = 0x10000, scoped, tag = 'input window, operand 1, single buffered']
    #allocation6 [shape = 's32[1]{0}', space=sflag, size = 0x4, scoped, tag = 'scoped memory for tpu_custom_call.1']
    #allocation7 [shape = 'u8[65536]{0}', space=vmem, size = 0x10000, scoped, tag = 'input window, operand 3, single buffered']
    #allocation8 [shape = 'u8[16384]{0}', space=vmem, size = 0x4000, scoped, tag = 'output window, operand 0']
    %12 = vsyncpa [#allocation3], 0
    %s13 = scalar_lea.sflag [#allocation3], 1
    %14 = vsyncpa %s13, 0
    %15 = vsyncpa [#allocation6], 0
    %16 = vsyncpa [#allocation4], 0
    %s17 = scalar_lea.sflag [#allocation4], 1
    %18 = vsyncpa %s17, 0
    loop: start=0, step=1, limit=4
    $region2: #{tpu_custom_call.1} parent=1 // loop_pre_header
      _
    $region3: #{tpu_custom_call.1} parent=1 // loop_header
      %s20 = sphi 0, %s24
      %p21 = scmp.ge.s32.totalorder %s20, 4
      %s30 = sphi 0, %s32
      %s33 = sphi 0, %s30
      %s34 = sphi 0, %s33
      %s50 = sphi 0, %s34
      %s54 = sphi 0, %s54
      %s56 = sphi 0, %s54
      %s57 = sphi 0, %s56
      %s71 = sphi 0, %s57
      %s75 = sphi 0, %s75
      %s77 = sphi 0, %s75
      %s78 = sphi 0, %s77
      %s92 = sphi 0, %s78
      %s96 = sphi 0, %s96
      %s98 = sphi 0, %s96
      %s99 = sphi 0, %s98
      %s113 = sphi 0, %s99
      %s117 = sphi 0, %s117
      %s119 = sphi 0, %s117
      %s120 = sphi 0, %s119
      %s134 = sphi 0, %s120
      %s138 = sphi 0, %s138
      %s140 = sphi 0, %s138
      %s141 = sphi 0, %s140
      %s155 = sphi 0, %s141
      %s159 = sphi 0, %s159
      %s161 = sphi 0, %s159
      %s162 = sphi 0, %s161
      %s176 = sphi 0, %s162
      %s182 = sphi 0, %s184
      %s185 = sphi 0, %s182
      %s186 = sphi 0, %s185
      %s202 = sphi 0, %s186
    $region4: #{tpu_custom_call.1} parent=1 // loop_header_branch
      %23 = sbr.rel (%p21) target = $region8
    $region5: #{tpu_custom_call.1} parent=1 // loop_body
      %s25 = ssub.s32 %s20, 1
      %s26 = ssub.s32 %s20, 2
      %s27 = sadd.s32 %s20, 1
      %s28 = ssub.s32 %s20, %s27
      %p29 = scmp.eq.s32.totalorder %s28, 0
      %s31 = sadd.s32 %s30, 1
      %s32 = scalar_select %p29, %s30, %s31
      %p35 = pneg %p29
      %p36 = scmp.eq.s32.totalorder %s20, 1
      %p37 = por %p35, %p36
      %p38 = scmp.ne.s32.totalorder %s30, %s33
      %p39 = scmp.eq.s32.totalorder %s20, 0
      %p40 = por %p38, %p39
      %p41 = scmp.ne.s32.totalorder %s30, %s33
      %p42 = scmp.eq.s32.totalorder %s25, 1
      %p43 = por %p41, %p42
      %p44 = scmp.ne.s32.totalorder %s33, %s34
      %p45 = scmp.eq.s32.totalorder %s25, 0
      %p46 = por %p44, %p45
      %p47 = scmp.ne.s32.totalorder %s33, %s34
      %p48 = scmp.eq.s32.totalorder %s26, 1
      %p49 = por %p47, %p48
      %p51 = scmp.ne.s32.totalorder %s34, %s50
      %p52 = scmp.eq.s32.totalorder %s26, 0
      %p53 = por %p51, %p52
      %s55 = sadd.s32 %s54, 1
      %p58 = scmp.eq.s32.totalorder %s20, 1
      %p59 = scmp.ne.s32.totalorder %s54, %s56
      %p60 = scmp.eq.s32.totalorder %s20, 0
      %p61 = por %p59, %p60
      %p62 = scmp.ne.s32.totalorder %s54, %s56
      %p63 = scmp.eq.s32.totalorder %s25, 1
      %p64 = por %p62, %p63
      %p65 = scmp.ne.s32.totalorder %s56, %s57
      %p66 = scmp.eq.s32.totalorder %s25, 0
      %p67 = por %p65, %p66
      %p68 = scmp.ne.s32.totalorder %s56, %s57
      %p69 = scmp.eq.s32.totalorder %s26, 1
      %p70 = por %p68, %p69
      %p72 = scmp.ne.s32.totalorder %s57, %s71
      %p73 = scmp.eq.s32.totalorder %s26, 0
      %p74 = por %p72, %p73
      %s76 = sadd.s32 %s75, 1
      %p79 = scmp.eq.s32.totalorder %s20, 1
      %p80 = scmp.ne.s32.totalorder %s75, %s77
      %p81 = scmp.eq.s32.totalorder %s20, 0
      %p82 = por %p80, %p81
      %p83 = scmp.ne.s32.totalorder %s75, %s77
      %p84 = scmp.eq.s32.totalorder %s25, 1
      %p85 = por %p83, %p84
      %p86 = scmp.ne.s32.totalorder %s77, %s78
      %p87 = scmp.eq.s32.totalorder %s25, 0
      %p88 = por %p86, %p87
      %p89 = scmp.ne.s32.totalorder %s77, %s78
      %p90 = scmp.eq.s32.totalorder %s26, 1
      %p91 = por %p89, %p90
      %p93 = scmp.ne.s32.totalorder %s78, %s92
      %p94 = scmp.eq.s32.totalorder %s26, 0
      %p95 = por %p93, %p94
      %s97 = sadd.s32 %s96, 1
      %p100 = scmp.eq.s32.totalorder %s20, 1
      %p101 = scmp.ne.s32.totalorder %s96, %s98
      %p102 = scmp.eq.s32.totalorder %s20, 0
      %p103 = por %p101, %p102
      %p104 = scmp.ne.s32.totalorder %s96, %s98
      %p105 = scmp.eq.s32.totalorder %s25, 1
      %p106 = por %p104, %p105
      %p107 = scmp.ne.s32.totalorder %s98, %s99
      %p108 = scmp.eq.s32.totalorder %s25, 0
      %p109 = por %p107, %p108
      %p110 = scmp.ne.s32.totalorder %s98, %s99
      %p111 = scmp.eq.s32.totalorder %s26, 1
      %p112 = por %p110, %p111
      %p114 = scmp.ne.s32.totalorder %s99, %s113
      %p115 = scmp.eq.s32.totalorder %s26, 0
      %p116 = por %p114, %p115
      %s118 = sadd.s32 %s117, 1
      %p121 = scmp.eq.s32.totalorder %s20, 1
      %p122 = scmp.ne.s32.totalorder %s117, %s119
      %p123 = scmp.eq.s32.totalorder %s20, 0
      %p124 = por %p122, %p123
      %p125 = scmp.ne.s32.totalorder %s117, %s119
      %p126 = scmp.eq.s32.totalorder %s25, 1
      %p127 = por %p125, %p126
      %p128 = scmp.ne.s32.totalorder %s119, %s120
      %p129 = scmp.eq.s32.totalorder %s25, 0
      %p130 = por %p128, %p129
      %p131 = scmp.ne.s32.totalorder %s119, %s120
      %p132 = scmp.eq.s32.totalorder %s26, 1
      %p133 = por %p131, %p132
      %p135 = scmp.ne.s32.totalorder %s120, %s134
      %p136 = scmp.eq.s32.totalorder %s26, 0
      %p137 = por %p135, %p136
      %s139 = sadd.s32 %s138, 1
      %p142 = scmp.eq.s32.totalorder %s20, 1
      %p143 = scmp.ne.s32.totalorder %s138, %s140
      %p144 = scmp.eq.s32.totalorder %s20, 0
      %p145 = por %p143, %p144
      %p146 = scmp.ne.s32.totalorder %s138, %s140
      %p147 = scmp.eq.s32.totalorder %s25, 1
      %p148 = por %p146, %p147
      %p149 = scmp.ne.s32.totalorder %s140, %s141
      %p150 = scmp.eq.s32.totalorder %s25, 0
      %p151 = por %p149, %p150
      %p152 = scmp.ne.s32.totalorder %s140, %s141
      %p153 = scmp.eq.s32.totalorder %s26, 1
      %p154 = por %p152, %p153
      %p156 = scmp.ne.s32.totalorder %s141, %s155
      %p157 = scmp.eq.s32.totalorder %s26, 0
      %p158 = por %p156, %p157
      %s160 = sadd.s32 %s159, 1
      %p163 = scmp.eq.s32.totalorder %s20, 1
      %p164 = scmp.ne.s32.totalorder %s159, %s161
      %p165 = scmp.eq.s32.totalorder %s20, 0
      %p166 = por %p164, %p165
      %p167 = scmp.ne.s32.totalorder %s159, %s161
      %p168 = scmp.eq.s32.totalorder %s25, 1
      %p169 = por %p167, %p168
      %p170 = scmp.ne.s32.totalorder %s161, %s162
      %p171 = scmp.eq.s32.totalorder %s25, 0
      %p172 = por %p170, %p171
      %p173 = scmp.ne.s32.totalorder %s161, %s162
      %p174 = scmp.eq.s32.totalorder %s26, 1
      %p175 = por %p173, %p174
      %p177 = scmp.ne.s32.totalorder %s162, %s176
      %p178 = scmp.eq.s32.totalorder %s26, 0
      %p179 = por %p177, %p178
      %s180 = ssub.s32 %s20, %s27
      %p181 = scmp.eq.s32.totalorder %s180, 0
      %s183 = sadd.s32 %s182, 1
      %s184 = scalar_select %p181, %s182, %s183
      %p187 = pneg %p181
      %p188 = scmp.eq.s32.totalorder %s20, 1
      %p189 = por %p187, %p188
      %p190 = scmp.ne.s32.totalorder %s182, %s185
      %p191 = scmp.eq.s32.totalorder %s20, 0
      %p192 = por %p190, %p191
      %p193 = scmp.ne.s32.totalorder %s182, %s185
      %p194 = scmp.eq.s32.totalorder %s25, 1
      %p195 = por %p193, %p194
      %p196 = scmp.ne.s32.totalorder %s185, %s186
      %p197 = scmp.eq.s32.totalorder %s25, 0
      %p198 = por %p196, %p197
      %p199 = scmp.ne.s32.totalorder %s185, %s186
      %p200 = scmp.eq.s32.totalorder %s26, 1
      %p201 = por %p199, %p200
      %p203 = scmp.ne.s32.totalorder %s186, %s202
      %p204 = scmp.eq.s32.totalorder %s26, 0
      %p205 = por %p203, %p204
      %p206 = scmp.le.s32.totalorder 1, %s20
      %p207 = scmp.lt.s32.totalorder %s20, 3
      %p208 = pnand %p206, %p207
      %p209 = pneg %p208
      // Predicated region
      $region9: #{tpu_custom_call.1} parent=5 // pred_check
        _
      $region10: #{tpu_custom_call.1} parent=5 // pred_check_branch
        %211 = sbr.rel (%p208) target = $region12
      $region11: #{tpu_custom_call.1} parent=5 // pred_region
        %s212 = ssub.s32 %s20, 1
        // Predicated region
        $region13: #{tpu_custom_call.1} parent=11 // pred_check
          %p213 = pneg %p67
        $region14: #{tpu_custom_call.1} parent=11 // pred_check_branch
          %215 = sbr.rel (%p213) target = $region16
        $region15: #{tpu_custom_call.1} parent=11 // pred_region
          %s217 = ssub.s32 2048, 2048
          %218 = vsyncadd [#allocation6], %s217
          %s219 = sshll.u32 [#allocation5], 4
          %s220 = int_to_ptr.vmem [resolvable:$true] %s219
          %225 = dma.hbm_to_vmem [thread:$0]  %s1, 2048, %s220, [#allocation6], 128, 128, 8
        $region16: #{tpu_custom_call.1} parent=11 // pred_fallthru
          _
        // Predicated region
        $region17: #{tpu_custom_call.1} parent=11 // pred_check
          %p226 = pneg %p88
        $region18: #{tpu_custom_call.1} parent=11 // pred_check_branch
          %228 = sbr.rel (%p226) target = $region20
        $region19: #{tpu_custom_call.1} parent=11 // pred_region
          _
        $region20: #{tpu_custom_call.1} parent=11 // pred_fallthru
          _
        // Predicated region
        $region21: #{tpu_custom_call.1} parent=11 // pred_check
          %p229 = pneg %p109
        $region22: #{tpu_custom_call.1} parent=11 // pred_check_branch
          %231 = sbr.rel (%p229) target = $region24
        $region23: #{tpu_custom_call.1} parent=11 // pred_region
          %s233 = ssub.s32 2048, 2048
          %234 = vsyncadd [#allocation6], %s233
          %s235 = sshll.u32 [#allocation7], 4
          %s236 = int_to_ptr.vmem [resolvable:$true] %s235
          %241 = dma.hbm_to_vmem [thread:$0]  %s3, 2048, %s236, [#allocation6], 64, 64, 4
        $region24: #{tpu_custom_call.1} parent=11 // pred_fallthru
          _
        // Predicated region
        $region25: #{tpu_custom_call.1} parent=11 // pred_check
          %p242 = pneg %p130
        $region26: #{tpu_custom_call.1} parent=11 // pred_check_branch
          %244 = sbr.rel (%p242) target = $region28
        $region27: #{tpu_custom_call.1} parent=11 // pred_region
          _
        $region28: #{tpu_custom_call.1} parent=11 // pred_fallthru
          _
        // Predicated region
        $region29: #{tpu_custom_call.1} parent=11 // pred_check
          %p245 = pneg %p151
        $region30: #{tpu_custom_call.1} parent=11 // pred_check_branch
          %247 = sbr.rel (%p245) target = $region32
        $region31: #{tpu_custom_call.1} parent=11 // pred_region
          _
        $region32: #{tpu_custom_call.1} parent=11 // pred_fallthru
          _
        // Predicated region
        $region33: #{tpu_custom_call.1} parent=11 // pred_check
          %p248 = pneg %p172
        $region34: #{tpu_custom_call.1} parent=11 // pred_check_branch
          %250 = sbr.rel (%p248) target = $region36
        $region35: #{tpu_custom_call.1} parent=11 // pred_region
          _
        $region36: #{tpu_custom_call.1} parent=11 // pred_fallthru
          _
      $region12: #{tpu_custom_call.1} parent=5 // pred_fallthru
        _
      %p251 = scmp.lt.s32.totalorder %s20, 2
      // Predicated region
      $region37: #{tpu_custom_call.1} parent=5 // pred_check
        %p252 = pneg %p251
      $region38: #{tpu_custom_call.1} parent=5 // pred_check_branch
        %254 = sbr.rel (%p252) target = $region40
      $region39: #{tpu_custom_call.1} parent=5 // pred_region
        // Predicated region
        $region41: #{tpu_custom_call.1} parent=39 // pred_check
          %p255 = pneg %p40
        $region42: #{tpu_custom_call.1} parent=39 // pred_check_branch
          %257 = sbr.rel (%p255) target = $region44
        $region43: #{tpu_custom_call.1} parent=39 // pred_region
          %s258 = sand.u32 %s30, 1
          %s259 = scalar_lea.sflag [#allocation3], %s258
          %s260 = sand.u32 %s30, 1
          %s261 = smul.addr %s260, 16
          %s262 = scalar_lea.vmem [#allocation2], %s261
          %s263 = smul.u32 2, %s20
          %s265 = ssub.s32 256, 256
          %266 = vsyncadd %s259, %s265
          %s267 = smul.addr %s263, 128
          %s268 = scalar_lea.hbm %s0, %s267
          %s269 = sshll.u32 %s262, 4
          %s270 = int_to_ptr.vmem [resolvable:$true] %s269
          %275 = dma.hbm_to_vmem [thread:$0]  %s268, 256, %s270, %s259, 128, 128, 8
        $region44: #{tpu_custom_call.1} parent=39 // pred_fallthru
          _
      $region40: #{tpu_custom_call.1} parent=5 // pred_fallthru
        _
      %p276 = scmp.le.s32.totalorder 1, %s20
      %p277 = scmp.lt.s32.totalorder %s20, 3
      %p278 = pnand %p276, %p277
      %p279 = pneg %p278
      // Predicated region
      $region45: #{tpu_custom_call.1} parent=5 // pred_check
        _
      $region46: #{tpu_custom_call.1} parent=5 // pred_check_branch
        %281 = sbr.rel (%p278) target = $region48
      $region47: #{tpu_custom_call.1} parent=5 // pred_region
        %s282 = ssub.s32 %s20, 1
        %s283 = sand.u32 %s33, 1
        %s284 = scalar_lea.sflag [#allocation3], %s283
        %s285 = sand.u32 %s33, 1
        %s286 = smul.addr %s285, 16
        %s287 = scalar_lea.vmem [#allocation2], %s286
        // Predicated region
        $region49: #{tpu_custom_call.1} parent=47 // pred_check
          %p288 = pneg %p46
        $region50: #{tpu_custom_call.1} parent=47 // pred_check_branch
          %290 = sbr.rel (%p288) target = $region52
        $region51: #{tpu_custom_call.1} parent=47 // pred_region
          %291 = dma.done %s284, 256
        $region52: #{tpu_custom_call.1} parent=47 // pred_fallthru
          _
        // Predicated region
        $region53: #{tpu_custom_call.1} parent=47 // pred_check
          %p292 = pneg %p67
        $region54: #{tpu_custom_call.1} parent=47 // pred_check_branch
          %294 = sbr.rel (%p292) target = $region56
        $region55: #{tpu_custom_call.1} parent=47 // pred_region
          %295 = dma.done [#allocation6], 2048
        $region56: #{tpu_custom_call.1} parent=47 // pred_fallthru
          _
        // Predicated region
        $region57: #{tpu_custom_call.1} parent=47 // pred_check
          %p296 = pneg %p109
        $region58: #{tpu_custom_call.1} parent=47 // pred_check_branch
          %298 = sbr.rel (%p296) target = $region60
        $region59: #{tpu_custom_call.1} parent=47 // pred_region
          %299 = dma.done [#allocation6], 2048
        $region60: #{tpu_custom_call.1} parent=47 // pred_fallthru
          _
        %s300 = sand.u32 %s33, 1
        %s301 = scalar_lea.sflag [#allocation3], %s300
        %s302 = sand.u32 %s33, 1
        %s303 = smul.addr %s302, 16
        %s304 = scalar_lea.vmem [#allocation2], %s303
        %p305 = pneg %p46
        %p306 = pneg %p43
        %p307 = pneg %p67
        %p308 = pneg %p64
        %p309 = pneg %p88
        %p310 = pneg %p85
        %p311 = pneg %p109
        %p312 = pneg %p106
        %p313 = pneg %p130
        %p314 = pneg %p127
        %p315 = pneg %p151
        %p316 = pneg %p148
        %p317 = pneg %p172
        %p318 = pneg %p169
        %p319 = pneg %p198
        %p320 = pneg %p195
        %s321 = sand.u32 %s185, 1
        %s322 = scalar_lea.sflag [#allocation4], %s321
        %s323 = sand.u32 %s185, 1
        %s324 = smul.addr %s323, 16
        %s325 = scalar_lea.vmem [#allocation8], %s324
        %s326 = smul.u32 2, %s25
        %s327 = smul.u32 2, %s25
        %v329 = vld [vmem:[%s287] sm:$0xff]
        %v330 = vld [vmem:[%s287 + $0x8] sm:$0xff]
        %v331 = vld [vmem:[%s5] sm:$0x1]
        %v332 = vld [vmem:[%s6] sm:$0x1]
        %v333 = vpack.c.bf16 %v330, %v329
        %v334 = vld [vmem:[#allocation5] sm:$0xff]
        %v335 = vld [vmem:[#allocation5 + $0x8] sm:$0xff]
        %v336 = vld [vmem:[#allocation5 + $0x10] sm:$0xff]
        %v337 = vld [vmem:[#allocation5 + $0x18] sm:$0xff]
        %v338 = vld [vmem:[#allocation5 + $0x20] sm:$0xff]
        %v339 = vld [vmem:[#allocation5 + $0x28] sm:$0xff]
        %v340 = vld [vmem:[#allocation5 + $0x30] sm:$0xff]
        %v341 = vld [vmem:[#allocation5 + $0x38] sm:$0xff]
        %v342 = vld [vmem:[#allocation5 + $0x40] sm:$0xff]
        %v343 = vld [vmem:[#allocation5 + $0x48] sm:$0xff]
        %v344 = vld [vmem:[#allocation5 + $0x50] sm:$0xff]
        %v345 = vld [vmem:[#allocation5 + $0x58] sm:$0xff]
        %v346 = vld [vmem:[#allocation5 + $0x60] sm:$0xff]
        %v347 = vld [vmem:[#allocation5 + $0x68] sm:$0xff]
        %v348 = vld [vmem:[#allocation5 + $0x70] sm:$0xff]
        %v349 = vld [vmem:[#allocation5 + $0x78] sm:$0xff]
        %v350 = vld [vmem:[%s2] sm:$0x3]
        %v352 = vlaneseq
        %v353 = vshrl.u32 %v352, 7
        %v354 = vsub.s32 0, %v353
        %v355 = vrot.slane %v350, %v354
        %v356 = vlaneseq
        %v357 = vshrl.u32 %v356, 7
        %v358 = vsub.s32 1, %v357
        %v359 = vrot.slane %v350, %v358
        %v378 = vunpack.c.l.b16 %v334
        %v379 = vunpack.c.h.b16 %v334
        %v380 = vunpack.c.l.b16 %v335
        %v381 = vunpack.c.h.b16 %v335
        %v382 = vunpack.c.l.b16 %v336
        %v383 = vunpack.c.h.b16 %v336
        %v384 = vunpack.c.l.b16 %v337
        %v385 = vunpack.c.h.b16 %v337
        %v386 = vunpack.c.l.b16 %v338
        %v387 = vunpack.c.h.b16 %v338
        %v388 = vunpack.c.l.b16 %v339
        %v389 = vunpack.c.h.b16 %v339
        %v390 = vunpack.c.l.b16 %v340
        %v391 = vunpack.c.h.b16 %v340
        %v392 = vunpack.c.l.b16 %v341
        %v393 = vunpack.c.h.b16 %v341
        %v394 = vunpack.c.l.b16 %v342
        %v395 = vunpack.c.h.b16 %v342
        %v396 = vunpack.c.l.b16 %v343
        %v397 = vunpack.c.h.b16 %v343
        %v398 = vunpack.c.l.b16 %v344
        %v399 = vunpack.c.h.b16 %v344
        %v400 = vunpack.c.l.b16 %v345
        %v401 = vunpack.c.h.b16 %v345
        %v402 = vunpack.c.l.b16 %v346
        %v403 = vunpack.c.h.b16 %v346
        %v404 = vunpack.c.l.b16 %v347
        %v405 = vunpack.c.h.b16 %v347
        %v406 = vunpack.c.l.b16 %v348
        %v407 = vunpack.c.h.b16 %v348
        %v408 = vunpack.c.l.b16 %v349
        %v409 = vunpack.c.h.b16 %v349
        %v410 = vpack.c.b16 %v380, %v378
        %v411 = vpack.c.b16 %v381, %v379
        %v412 = vpack.c.b16 %v384, %v382
        %v413 = vpack.c.b16 %v385, %v383
        %v414 = vpack.c.b16 %v388, %v386
        %v415 = vpack.c.b16 %v389, %v387
        %v416 = vpack.c.b16 %v392, %v390
        %v417 = vpack.c.b16 %v393, %v391
        %v418 = vpack.c.b16 %v396, %v394
        %v419 = vpack.c.b16 %v397, %v395
        %v420 = vpack.c.b16 %v400, %v398
        %v421 = vpack.c.b16 %v401, %v399
        %v422 = vpack.c.b16 %v404, %v402
        %v423 = vpack.c.b16 %v405, %v403
        %v424 = vpack.c.b16 %v408, %v406
        %v425 = vpack.c.b16 %v409, %v407
        %442 = vmatprep.subr.bf16.mxu0 %v425
        %443 = vmatpush1.bf16.msra.mxu0 %v424
        %444 = vmatprep.subr.bf16.mxu0 %v423
        %445 = vmatpush1.bf16.msra.mxu0 %v422
        %446 = vmatprep.subr.bf16.mxu0 %v421
        %447 = vmatpush1.bf16.msra.mxu0 %v420
        %448 = vmatprep.subr.bf16.mxu0 %v419
        %449 = vmatpush1.bf16.msra.mxu0 %v418
        %450 = vmatprep.subr.bf16.mxu0 %v417
        %451 = vmatpush1.bf16.msra.mxu0 %v416
        %452 = vmatprep.subr.bf16.mxu0 %v415
        %453 = vmatpush1.bf16.msra.mxu0 %v414
        %454 = vmatprep.subr.bf16.mxu0 %v413
        %455 = vmatpush1.bf16.msra.mxu0 %v412
        %456 = vmatprep.subr.bf16.mxu0 %v411
        %457 = vmatpush1.bf16.msra.mxu0 %v410
        %458 = vmatprep.subr.bf16.mxu0 0
        %459 = vmatpush2.bf16.msra.mxu0 0
        %460 = vmatprep.subr.bf16.mxu0 0
        %461 = vmatpush2.bf16.msra.mxu0 0
        %462 = vmatprep.subr.bf16.mxu0 0
        %463 = vmatpush2.bf16.msra.mxu0 0
        %464 = vmatprep.subr.bf16.mxu0 0
        %465 = vmatpush2.bf16.msra.mxu0 0
        %466 = vmatprep.subr.bf16.mxu0 0
        %467 = vmatpush2.bf16.msra.mxu0 0
        %468 = vmatprep.subr.bf16.mxu0 0
        %469 = vmatpush2.bf16.msra.mxu0 0
        %470 = vmatprep.subr.bf16.mxu0 0
        %471 = vmatpush2.bf16.msra.mxu0 0
        %472 = vmatprep.subr.bf16.mxu0 0
        %473 = vmatpush2.bf16.msra.mxu0 0
        %474 = vmatprep.mubr.bf16.mxu0 0
        %475 = vmatmul.mubr.bf16.gmra.mxu0 %v333
        %v476 = vpop.f32.mrf.mxu0
        %v477 = vadd.f32 %v355, %v476
        %v478 = vpop.f32.mrf.mxu0
        %v479 = vadd.f32 %v359, %v478
        %v480 = vpop.f32.mrf.mxu0
        %v481 = vadd.f32 %v355, %v480
        %v482 = vpop.f32.mrf.mxu0
        %v483 = vadd.f32 %v359, %v482
        %484 = vdwg.mxu0
        %v485 = vmax.f32 %v477, 0.0
        %v486 = vmax.f32 %v479, 0.0
        %v487 = vmax.f32 %v481, 0.0
        %v488 = vmax.f32 %v483, 0.0
        %v489 = vpack.c.bf16 %v487, %v485
        %v490 = vpack.c.bf16 %v488, %v486
        %v491 = vld [vmem:[#allocation7] sm:$0xf]
        %v492 = vld [vmem:[#allocation7 + $0x4] sm:$0xf]
        %v493 = vld [vmem:[#allocation7 + $0x8] sm:$0xf]
        %v494 = vld [vmem:[#allocation7 + $0xc] sm:$0xf]
        %v495 = vld [vmem:[#allocation7 + $0x10] sm:$0xf]
        %v496 = vld [vmem:[#allocation7 + $0x14] sm:$0xf]
        %v497 = vld [vmem:[#allocation7 + $0x18] sm:$0xf]
        %v498 = vld [vmem:[#allocation7 + $0x1c] sm:$0xf]
        %v499 = vld [vmem:[#allocation7 + $0x20] sm:$0xf]
        %v500 = vld [vmem:[#allocation7 + $0x24] sm:$0xf]
        %v501 = vld [vmem:[#allocation7 + $0x28] sm:$0xf]
        %v502 = vld [vmem:[#allocation7 + $0x2c] sm:$0xf]
        %v503 = vld [vmem:[#allocation7 + $0x30] sm:$0xf]
        %v504 = vld [vmem:[#allocation7 + $0x34] sm:$0xf]
        %v505 = vld [vmem:[#allocation7 + $0x38] sm:$0xf]
        %v506 = vld [vmem:[#allocation7 + $0x3c] sm:$0xf]
        %v507 = vld [vmem:[#allocation7 + $0x40] sm:$0xf]
        %v508 = vld [vmem:[#allocation7 + $0x44] sm:$0xf]
        %v509 = vld [vmem:[#allocation7 + $0x48] sm:$0xf]
        %v510 = vld [vmem:[#allocation7 + $0x4c] sm:$0xf]
        %v511 = vld [vmem:[#allocation7 + $0x50] sm:$0xf]
        %v512 = vld [vmem:[#allocation7 + $0x54] sm:$0xf]
        %v513 = vld [vmem:[#allocation7 + $0x58] sm:$0xf]
        %v514 = vld [vmem:[#allocation7 + $0x5c] sm:$0xf]
        %v515 = vld [vmem:[#allocation7 + $0x60] sm:$0xf]
        %v516 = vld [vmem:[#allocation7 + $0x64] sm:$0xf]
        %v517 = vld [vmem:[#allocation7 + $0x68] sm:$0xf]
        %v518 = vld [vmem:[#allocation7 + $0x6c] sm:$0xf]
        %v519 = vld [vmem:[#allocation7 + $0x70] sm:$0xf]
        %v520 = vld [vmem:[#allocation7 + $0x74] sm:$0xf]
        %v521 = vld [vmem:[#allocation7 + $0x78] sm:$0xf]
        %v522 = vld [vmem:[#allocation7 + $0x7c] sm:$0xf]
        %v523 = vld [vmem:[%s4] sm:$0x1]
        %v525 = vlaneseq
        %v526 = vshrl.u32 %v525, 7
        %v527 = vsub.s32 0, %v526
        %v528 = vrot.slane %v523, %v527
        %v562 = vunpack.c.l.b16 %v491
        %v563 = vunpack.c.l.b16 %v492
        %v564 = vunpack.c.l.b16 %v493
        %v565 = vunpack.c.l.b16 %v494
        %v566 = vunpack.c.l.b16 %v495
        %v567 = vunpack.c.l.b16 %v496
        %v568 = vunpack.c.l.b16 %v497
        %v569 = vunpack.c.l.b16 %v498
        %v570 = vunpack.c.l.b16 %v499
        %v571 = vunpack.c.l.b16 %v500
        %v572 = vunpack.c.l.b16 %v501
        %v573 = vunpack.c.l.b16 %v502
        %v574 = vunpack.c.l.b16 %v503
        %v575 = vunpack.c.l.b16 %v504
        %v576 = vunpack.c.l.b16 %v505
        %v577 = vunpack.c.l.b16 %v506
        %v578 = vunpack.c.l.b16 %v507
        %v579 = vunpack.c.l.b16 %v508
        %v580 = vunpack.c.l.b16 %v509
        %v581 = vunpack.c.l.b16 %v510
        %v582 = vunpack.c.l.b16 %v511
        %v583 = vunpack.c.l.b16 %v512
        %v584 = vunpack.c.l.b16 %v513
        %v585 = vunpack.c.l.b16 %v514
        %v586 = vunpack.c.l.b16 %v515
        %v587 = vunpack.c.l.b16 %v516
        %v588 = vunpack.c.l.b16 %v517
        %v589 = vunpack.c.l.b16 %v518
        %v590 = vunpack.c.l.b16 %v519
        %v591 = vunpack.c.l.b16 %v520
        %v592 = vunpack.c.l.b16 %v521
        %v593 = vunpack.c.l.b16 %v522
        %v594 = vpack.c.b16 %v563, %v562
        %v595 = vpack.c.b16 %v565, %v564
        %v596 = vpack.c.b16 %v567, %v566
        %v597 = vpack.c.b16 %v569, %v568
        %v598 = vpack.c.b16 %v571, %v570
        %v599 = vpack.c.b16 %v573, %v572
        %v600 = vpack.c.b16 %v575, %v574
        %v601 = vpack.c.b16 %v577, %v576
        %v602 = vpack.c.b16 %v579, %v578
        %v603 = vpack.c.b16 %v581, %v580
        %v604 = vpack.c.b16 %v583, %v582
        %v605 = vpack.c.b16 %v585, %v584
        %v606 = vpack.c.b16 %v587, %v586
        %v607 = vpack.c.b16 %v589, %v588
        %v608 = vpack.c.b16 %v591, %v590
        %v609 = vpack.c.b16 %v593, %v592
        %626 = vmatprep.subr.bf16.mxu0 0
        %627 = vmatpush1.bf16.msra.mxu0 %v601
        %628 = vmatprep.subr.bf16.mxu0 0
        %629 = vmatpush1.bf16.msra.mxu0 %v600
        %630 = vmatprep.subr.bf16.mxu0 0
        %631 = vmatpush1.bf16.msra.mxu0 %v599
        %632 = vmatprep.subr.bf16.mxu0 0
        %633 = vmatpush1.bf16.msra.mxu0 %v598
        %634 = vmatprep.subr.bf16.mxu0 0
        %635 = vmatpush1.bf16.msra.mxu0 %v597
        %636 = vmatprep.subr.bf16.mxu0 0
        %637 = vmatpush1.bf16.msra.mxu0 %v596
        %638 = vmatprep.subr.bf16.mxu0 0
        %639 = vmatpush1.bf16.msra.mxu0 %v595
        %640 = vmatprep.subr.bf16.mxu0 0
        %641 = vmatpush1.bf16.msra.mxu0 %v594
        %642 = vmatprep.subr.bf16.mxu0 0
        %643 = vmatpush2.bf16.msra.mxu0 %v609
        %644 = vmatprep.subr.bf16.mxu0 0
        %645 = vmatpush2.bf16.msra.mxu0 %v608
        %646 = vmatprep.subr.bf16.mxu0 0
        %647 = vmatpush2.bf16.msra.mxu0 %v607
        %648 = vmatprep.subr.bf16.mxu0 0
        %649 = vmatpush2.bf16.msra.mxu0 %v606
        %650 = vmatprep.subr.bf16.mxu0 0
        %651 = vmatpush2.bf16.msra.mxu0 %v605
        %652 = vmatprep.subr.bf16.mxu0 0
        %653 = vmatpush2.bf16.msra.mxu0 %v604
        %654 = vmatprep.subr.bf16.mxu0 0
        %655 = vmatpush2.bf16.msra.mxu0 %v603
        %656 = vmatprep.subr.bf16.mxu0 0
        %657 = vmatpush2.bf16.msra.mxu0 %v602
        %658 = vmatprep.mubr.bf16.mxu0 %v490
        %659 = vmatmul.mubr.bf16.gmra.mxu0 %v489
        %v660 = vpop.f32.mrf.mxu0
        %v661 = vadd.f32 %v528, %v660
        %v662 = vpop.f32.mrf.mxu0
        %v663 = vpop.f32.mrf.mxu0
        %v664 = vadd.f32 %v528, %v663
        %v665 = vpop.f32.mrf.mxu0
        %666 = vdwg.mxu0
        %v667 = vadd.f32 %v329, %v661
        %v668 = vadd.f32 %v330, %v664
        %669 = vadd.xlane.f32.xlu0 %v667
        %v670 = vpop.xlane.xlu0 %669
        %671 = vadd.xlane.f32.xlu0 %v668
        %v672 = vpop.xlane.xlu0 %671
        %v673 = vrcp.pop 128.0
        %v674 = vmul.f32 %v670, %v673
        %v675 = vmul.f32 %v672, %v673
        %v676 = vsub.f32 %v667, %v674
        %v677 = vsub.f32 %v668, %v675
        %v678 = vmul.f32 %v676, %v676
        %v679 = vmul.f32 %v677, %v677
        %680 = vadd.xlane.f32.xlu0 %v678
        %v681 = vpop.xlane.xlu0 %680
        %682 = vadd.xlane.f32.xlu0 %v679
        %v683 = vpop.xlane.xlu0 %682
        %v684 = vmul.f32 %v681, %v673
        %v685 = vmul.f32 %v683, %v673
        %v686 = vadd.f32 %v684, 1e-05
        %v687 = vadd.f32 %v685, 1e-05
        %v688 = vrsqrt.pop %v686
        %v689 = vrsqrt.pop %v687
        %v690 = vmul.f32 %v676, %v688
        %v691 = vmul.f32 %v677, %v689
        %v693 = vlaneseq
        %v694 = vshrl.u32 %v693, 7
        %v695 = vsub.s32 0, %v694
        %v696 = vrot.slane %v331, %v695
        %v698 = vmul.f32 %v690, %v696
        %v699 = vmul.f32 %v691, %v696
        %v701 = vlaneseq
        %v702 = vshrl.u32 %v701, 7
        %v703 = vsub.s32 0, %v702
        %v704 = vrot.slane %v332, %v703
        %v706 = vadd.f32 %v698, %v704
        %v707 = vadd.f32 %v699, %v704
        %708 = vst [vmem:[%s325] sm:$0xff] %v706
        %709 = vst [vmem:[%s325 + $0x8] sm:$0xff] %v707
        %s710 = sand.u32 %s185, 1
        %s711 = scalar_lea.sflag [#allocation4], %s710
        %s712 = sand.u32 %s185, 1
        %s713 = smul.addr %s712, 16
        %s714 = scalar_lea.vmem [#allocation8], %s713
        // Predicated region
        $region61: #{tpu_custom_call.1} parent=47 // pred_check
          %p715 = pneg %p195
        $region62: #{tpu_custom_call.1} parent=47 // pred_check_branch
          %717 = sbr.rel (%p715) target = $region64
        $region63: #{tpu_custom_call.1} parent=47 // pred_region
          %s718 = smul.u32 2, %s25
          %s720 = ssub.s32 256, 256
          %721 = vsyncadd %s711, %s720
          %s722 = smul.addr %s718, 128
          %s723 = scalar_lea.hbm %s7, %s722
          %s724 = sshll.u32 %s714, 4
          %s725 = int_to_ptr.vmem [resolvable:$true] %s724
          %730 = dma.vmem_to_hbm [thread:$0]  %s725, 256, %s723, %s711, 128, 128, 8
        $region64: #{tpu_custom_call.1} parent=47 // pred_fallthru
          _
      $region48: #{tpu_custom_call.1} parent=5 // pred_fallthru
        _
      %p731 = scmp.le.s32.totalorder 2, %s20
      // Predicated region
      $region65: #{tpu_custom_call.1} parent=5 // pred_check
        %p732 = pneg %p731
      $region66: #{tpu_custom_call.1} parent=5 // pred_check_branch
        %734 = sbr.rel (%p732) target = $region68
      $region67: #{tpu_custom_call.1} parent=5 // pred_region
        %s735 = ssub.s32 %s20, 2
        // Predicated region
        $region69: #{tpu_custom_call.1} parent=67 // pred_check
          %p736 = pneg %p201
        $region70: #{tpu_custom_call.1} parent=67 // pred_check_branch
          %738 = sbr.rel (%p736) target = $region72
        $region71: #{tpu_custom_call.1} parent=67 // pred_region
          %s739 = sand.u32 %s186, 1
          %s740 = scalar_lea.sflag [#allocation4], %s739
          %s741 = sand.u32 %s186, 1
          %s742 = smul.addr %s741, 16
          %s743 = scalar_lea.vmem [#allocation8], %s742
          %744 = dma.done %s740, 256
        $region72: #{tpu_custom_call.1} parent=67 // pred_fallthru
          _
      $region68: #{tpu_custom_call.1} parent=5 // pred_fallthru
        _
    $region6: #{tpu_custom_call.1} parent=1 // loop_footer
      %s24 = sadd.s32 1, %s20
    $region7: #{tpu_custom_call.1} parent=1 // loop_footer_branch
      %19 = sbr.rel target = $region3
    $region8: #{tpu_custom_call.1} parent=1 // loop_exit
      _
    %745 = vsyncpa [#allocation3], 1
    %s746 = scalar_lea.sflag [#allocation3], 1
    %747 = vsyncpa %s746, 1
    %748 = vsyncpa [#allocation6], 1
    %749 = vsyncpa [#allocation4], 1
    %s750 = scalar_lea.sflag [#allocation4], 1
    %751 = vsyncpa %s750, 1

</llo_original>
